<compile_context>
chip_gen: v7x
topology: tpu7x:2x2x1
jax: 0.10.0
libtpu: 0.0.40
codegen_flags: <defaults>
</compile_context>

<pallas_src>
import functools

import jax
import jax.numpy as jnp
import numpy as np
from jax import lax
from jax.experimental import pallas as pl
from jax.experimental.pallas import tpu as pltpu


def _round_up(a, b):
    return (a + b - 1) // b * b


def retrieval_linear_kernel(x_ref, w_ref, b_ref, n_ref, sm_ref, o_ref, *,
                            cls_tile, cls_row):
    """One (batch, N-tile, M-tile) grid step.

    x_ref  : (TM, Fin)   activations (compute dtype: f32 or bf16)
    w_ref  : (TN, Fin)   weight slice in torch (Fout, Fin) layout (no transpose)
    b_ref  : (1, TN)     bias (f32)
    n_ref  : (K, TN)     retrieved neighbors for this batch element (f32)
    sm_ref : (1, K)      softmax(mask) / K, precomputed in the wrapper (f32)
    o_ref  : (TM, TN)    output tile
    """
    x = x_ref[...]
    w = w_ref[...]
    # Contract the last dim of both operands: (TM,Fin) x (TN,Fin) -> (TM,TN).
    y = lax.dot_general(x, w, (((1,), (1,)), ((), ())),
                        preferred_element_type=jnp.float32)
    y = y + b_ref[...]                                    # f32 epilogue
    o_ref[...] = y.astype(o_ref.dtype)

    # Retrieval fusion only touches the cls row; only the M tile containing it
    # does the extra (tiny) work.
    @pl.when(pl.program_id(2) == cls_tile)
    def _():
        fused = jnp.dot(sm_ref[...], n_ref[...],
                        preferred_element_type=jnp.float32)   # (1, TN)
        o_ref[cls_row:cls_row + 1, :] = (
            y[cls_row:cls_row + 1, :] + fused).astype(o_ref.dtype)


def retrieval_linear(x, weight, bias, neighbors, mask, *, cls_pos=0,
                     compute_dtype=jnp.float32):
    """x: (B,S,Fin), weight: (Fout,Fin), bias: (Fout,),
    neighbors: (B,K,Fout), mask: (K,1).  Returns (B,S,Fout) in x.dtype."""
    B, S, Fin = x.shape
    Fout = weight.shape[0]
    K = neighbors.shape[1]
    out_dtype = x.dtype

    # ---- tile sizes ----
    # Lane-dense output: pad Fout up to a multiple of 128.
    Fout_p = _round_up(Fout, 128)
    TN = min(512, Fout_p)
    Fout_p = _round_up(Fout_p, TN)          # ensure TN | Fout_p
    # M tiles: up to 256 rows (v6e/v7x MXU height), sublane (8) aligned.
    TM = min(256, _round_up(S, 8))
    S_p = _round_up(S, TM)

    # ---- wrapper-side padding / casts ----
    x_p = x if S_p == S else jnp.pad(x, ((0, 0), (0, S_p - S), (0, 0)))
    if Fout_p != Fout:
        w_p = jnp.pad(weight, ((0, Fout_p - Fout), (0, 0)))
        b_p = jnp.pad(bias, ((0, Fout_p - Fout),))
        n_p = jnp.pad(neighbors, ((0, 0), (0, 0), (0, Fout_p - Fout)))
    else:
        w_p, b_p, n_p = weight, bias, neighbors

    x_p = x_p.astype(compute_dtype)
    w_p = w_p.astype(compute_dtype)
    b2 = b_p.reshape(1, Fout_p).astype(jnp.float32)
    n_p = n_p.astype(jnp.float32)

    # Batch-independent: softmax over K with the 1/K mean folded in.
    sm = jax.nn.softmax(mask.astype(jnp.float32), axis=0)        # (K, 1)
    sm_scaled = (sm / K).reshape(1, K)

    grid = (B, Fout_p // TN, S_p // TM)     # (batch, N tiles, M tiles)
    cls_tile, cls_row = cls_pos // TM, cls_pos % TM

    kernel = functools.partial(retrieval_linear_kernel,
                               cls_tile=cls_tile, cls_row=cls_row)

    out_p = pl.pallas_call(
        kernel,
        out_shape=jax.ShapeDtypeStruct((B, S_p, Fout_p), out_dtype),
        grid_spec=pltpu.PrefetchScalarGridSpec(
            num_scalar_prefetch=0,
            grid=grid,
            in_specs=[
                # x: changes with (b, m)
                pl.BlockSpec((pl.Squeezed(), TM, Fin),
                             lambda b, n, m: (b, m, 0)),
                # W: constant along b and m -> stays resident across the M sweep
                pl.BlockSpec((TN, Fin), lambda b, n, m: (n, 0)),
                # bias: constant along b and m
                pl.BlockSpec((1, TN), lambda b, n, m: (0, n)),
                # neighbors: constant along m
                pl.BlockSpec((pl.Squeezed(), K, TN),
                             lambda b, n, m: (b, 0, n)),
                # softmax(mask)/K: constant
                pl.BlockSpec((1, K), lambda b, n, m: (0, 0)),
            ],
            out_specs=pl.BlockSpec((pl.Squeezed(), TM, TN),
                                   lambda b, n, m: (b, m, n)),
        ),
        compiler_params=pltpu.CompilerParams(
            dimension_semantics=("parallel", "parallel", "parallel")),
    )(x_p, w_p, b2, n_p, sm_scaled)

    return out_p[:, :S, :Fout]


def retrieval_linear_ref(x, weight, bias, neighbors, mask, cls_pos=0):
    # pure-JAX reference mirroring the PyTorch forward ('mask_add_cls')
    y = jnp.einsum("bsi,oi->bso", x, weight) + bias[None, None, :]
    sm = jax.nn.softmax(mask, axis=0)                         # (K, 1)
    fused = jnp.mean(sm[None] * neighbors, axis=1)            # (B, Fout)
    add = jnp.zeros_like(y).at[:, cls_pos, :].set(fused)
    return y + add


if __name__ == "__main__":
    B, S = 2, 8
    in_features, out_features = 32, 32
    topk = 8                     # retriever.topk; retrieval_dim == out_features

    key = jax.random.PRNGKey(0)
    kx, kw, kb, kn, km = jax.random.split(key, 5)

    x = jax.random.normal(kx, (B, S, in_features), dtype=jnp.float32)
    weight = jax.random.uniform(kw, (out_features, in_features),
                                minval=-0.3, maxval=0.3, dtype=jnp.float32)
    bias = jax.random.uniform(kb, (out_features,),
                              minval=-0.1, maxval=0.1, dtype=jnp.float32)
    # synthetic retriever output: neighbors of queries x[:, 0, :]
    neighbors = jax.random.normal(kn, (B, topk, out_features), dtype=jnp.float32)
    mask_param = jax.random.uniform(km, (topk, 1),
                                    minval=-0.5, maxval=0.5, dtype=jnp.float32)

    ref = retrieval_linear_ref(x, weight, bias, neighbors, mask_param)

    # f32 path: tight correctness check.
    out_f32 = retrieval_linear(x, weight, bias, neighbors, mask_param,
                               compute_dtype=jnp.float32)
    out_f32 = jax.block_until_ready(out_f32)
    np.testing.assert_allclose(np.asarray(out_f32), np.asarray(ref),
                               rtol=1e-5, atol=1e-5)

    # bf16 matmul inputs / f32 accumulation (recommended on v6e/v7x): loose check.
    out_bf16 = retrieval_linear(x, weight, bias, neighbors, mask_param,
                                compute_dtype=jnp.bfloat16)
    out_bf16 = jax.block_until_ready(out_bf16)
    np.testing.assert_allclose(np.asarray(out_bf16), np.asarray(ref),
                               rtol=5e-2, atol=5e-2)

    print("KERNEL_OK")
</pallas_src>

<mosaic_0001>
module attributes {stable_mosaic.version = 11 : i64} {
  func.func @retrieval_linear_kernel(%arg0: i32, %arg1: i32, %arg2: i32, %arg3: memref<1x8x32xf32, #tpu.memory_space<vmem>>, %arg4: memref<128x32xf32, #tpu.memory_space<vmem>>, %arg5: memref<1x128xf32, #tpu.memory_space<vmem>>, %arg6: memref<1x8x128xf32, #tpu.memory_space<vmem>>, %arg7: memref<1x8xf32, #tpu.memory_space<vmem>>, %arg8: memref<1x8x128xf32, #tpu.memory_space<vmem>>) attributes {dimension_semantics = [#tpu.dimension_semantics<parallel>, #tpu.dimension_semantics<parallel>, #tpu.dimension_semantics<parallel>], iteration_bounds = array<i64: 2, 1, 1>, scalar_prefetch = 0 : i64, scratch_operands = 0 : i64, tpu.core_type = #tpu.core_type<tc>, window_params = [{transform_indices = @transform_0, window_bounds = array<i64: 1, 8, 32>}, {transform_indices = @transform_1, window_bounds = array<i64: 128, 32>}, {transform_indices = @transform_2, window_bounds = array<i64: 1, 128>}, {transform_indices = @transform_3, window_bounds = array<i64: 1, 8, 128>}, {pipeline_mode = #tpu.pipeline_mode<synchronous>, transform_indices = @transform_4, window_bounds = array<i64: 1, 8>}, {transform_indices = @transform_5, window_bounds = array<i64: 1, 8, 128>}]} {
    %c0 = arith.constant 0 : index
    %c0_0 = arith.constant 0 : index
    %c0_1 = arith.constant 0 : index
    %0 = vector.load %arg3[%c0, %c0_0, %c0_1] : memref<1x8x32xf32, #tpu.memory_space<vmem>>, vector<1x8x32xf32>
    %1 = vector.shape_cast %0 : vector<1x8x32xf32> to vector<8x32xf32>
    %c0_2 = arith.constant 0 : index
    %c0_3 = arith.constant 0 : index
    %2 = vector.load %arg4[%c0_2, %c0_3] : memref<128x32xf32, #tpu.memory_space<vmem>>, vector<128x32xf32>
    %cst = arith.constant dense<0.000000e+00> : vector<8x128xf32>
    %3 = tpu.matmul %1, %2, %cst {dimension_numbers = #tpu.dot_dimension_numbers<[1], [1], [0], [0], [0, 0, 1, 0], [], []>} : vector<8x32xf32>, vector<128x32xf32>, vector<8x128xf32> -> vector<8x128xf32>
    %c0_4 = arith.constant 0 : index
    %c0_5 = arith.constant 0 : index
    %4 = vector.load %arg5[%c0_4, %c0_5] : memref<1x128xf32, #tpu.memory_space<vmem>>, vector<1x128xf32>
    %5 = vector.broadcast %4 : vector<1x128xf32> to vector<8x128xf32>
    %6 = arith.addf %3, %5 : vector<8x128xf32>
    %c0_6 = arith.constant 0 : index
    %c0_7 = arith.constant 0 : index
    %c0_8 = arith.constant 0 : index
    %7 = vector.load %arg8[%c0_6, %c0_7, %c0_8] : memref<1x8x128xf32, #tpu.memory_space<vmem>>, vector<1x8x128xf32>
    %8 = vector.shape_cast %7 : vector<1x8x128xf32> to vector<8x128xf32>
    %9 = vector.shape_cast %6 : vector<8x128xf32> to vector<1x8x128xf32>
    tpu.vector_store %arg8[%c0_6, %c0_7, %c0_8], %9 {strides = array<i32>} : memref<1x8x128xf32, #tpu.memory_space<vmem>>, vector<1x8x128xf32>,
    %c0_i32 = arith.constant 0 : i32
    %10 = arith.cmpi eq, %arg2, %c0_i32 : i32
    %11 = arith.extui %10 : i1 to i32
    %c0_i32_9 = arith.constant 0 : i32
    %12 = arith.cmpi ne, %11, %c0_i32_9 : i32
    scf.if %12 {
      %c0_10 = arith.constant 0 : index
      %c0_11 = arith.constant 0 : index
      %13 = vector.load %arg7[%c0_10, %c0_11] : memref<1x8xf32, #tpu.memory_space<vmem>>, vector<1x8xf32>
      %c0_12 = arith.constant 0 : index
      %c0_13 = arith.constant 0 : index
      %c0_14 = arith.constant 0 : index
      %14 = vector.load %arg6[%c0_12, %c0_13, %c0_14] : memref<1x8x128xf32, #tpu.memory_space<vmem>>, vector<1x8x128xf32>
      %15 = vector.shape_cast %14 : vector<1x8x128xf32> to vector<8x128xf32>
      %cst_15 = arith.constant dense<0.000000e+00> : vector<1x128xf32>
      %16 = tpu.matmul %13, %15, %cst_15 {dimension_numbers = #tpu.dot_dimension_numbers<[1], [0], [0], [1], [0, 0, 1, 1], [], []>} : vector<1x8xf32>, vector<8x128xf32>, vector<1x128xf32> -> vector<1x128xf32>
      %17 = vector.extract_strided_slice %6 {offsets = [0, 0], sizes = [1, 128], strides = [1, 1]} : vector<8x128xf32> to vector<1x128xf32>
      %18 = arith.addf %17, %16 : vector<1x128xf32>
      %c0_16 = arith.constant 0 : index
      %c0_17 = arith.constant 0 : index
      %c0_18 = arith.constant 0 : index
      %19 = vector.load %arg8[%c0_16, %c0_17, %c0_18] : memref<1x8x128xf32, #tpu.memory_space<vmem>>, vector<1x1x128xf32>
      %20 = vector.shape_cast %19 : vector<1x1x128xf32> to vector<1x128xf32>
      %21 = vector.shape_cast %18 : vector<1x128xf32> to vector<1x1x128xf32>
      tpu.vector_store %arg8[%c0_16, %c0_17, %c0_18], %21 {strides = array<i32>} : memref<1x8x128xf32, #tpu.memory_space<vmem>>, vector<1x1x128xf32>,
    } else {
    }
    return
  }
  func.func @transform_0(%arg0: i32, %arg1: i32, %arg2: i32) -> (i32, i32, i32) {
    %c0_i32 = arith.constant 0 : i32
    %c0_i32_0 = arith.constant 0 : i32
    return %arg0, %arg2, %c0_i32 : i32, i32, i32
  }
  func.func @transform_1(%arg0: i32, %arg1: i32, %arg2: i32) -> (i32, i32) {
    %c0_i32 = arith.constant 0 : i32
    %c0_i32_0 = arith.constant 0 : i32
    return %arg1, %c0_i32 : i32, i32
  }
  func.func @transform_2(%arg0: i32, %arg1: i32, %arg2: i32) -> (i32, i32) {
    %c0_i32 = arith.constant 0 : i32
    %c0_i32_0 = arith.constant 0 : i32
    return %c0_i32, %arg1 : i32, i32
  }
  func.func @transform_3(%arg0: i32, %arg1: i32, %arg2: i32) -> (i32, i32, i32) {
    %c0_i32 = arith.constant 0 : i32
    %c0_i32_0 = arith.constant 0 : i32
    return %arg0, %c0_i32, %arg1 : i32, i32, i32
  }
  func.func @transform_4(%arg0: i32, %arg1: i32, %arg2: i32) -> (i32, i32) {
    %c0_i32 = arith.constant 0 : i32
    %c0_i32_0 = arith.constant 0 : i32
    %c0_i32_1 = arith.constant 0 : i32
    return %c0_i32, %c0_i32_0 : i32, i32
  }
  func.func @transform_5(%arg0: i32, %arg1: i32, %arg2: i32) -> (i32, i32, i32) {
    %c0_i32 = arith.constant 0 : i32
    return %arg0, %arg2, %arg1 : i32, i32, i32
  }
}

</mosaic_0001>

<llo_original>
// kernel: tpu_custom_call.1
$region0: #{tpu_custom_call.1}
  #allocation0 [shape = 'u32[]', space=smem, size = 0x4, offset = 0x4, fixed_abs, tag = 'smem constant byte address 0x4 - core index']
  #allocation1 [shape = 'u32[144,128]{1,0:T(1,128)}', space=vmem, size = 0x12000, scoped, tag = 'internal scratch']
  %s0 = inlined_call_operand.vmem [shape: f32[2,8,32], index: 0, kind: input, shape index: {}]
  %s1 = inlined_call_operand.vmem [shape: f32[128,32], index: 1, kind: input, shape index: {}]
  %s2 = inlined_call_operand.vmem [shape: f32[1,128], index: 2, kind: input, shape index: {}]
  %s3 = inlined_call_operand.vmem [shape: f32[2,8,128], index: 3, kind: input, shape index: {}]
  %s4 = inlined_call_operand.vmem [shape: f32[1,8], index: 4, kind: input, shape index: {}]
  %s5 = inlined_call_operand.hbm [shape: f32[2,8,128], index: 5, kind: output, shape index: {}]
  %s6 = sld [smem:[#allocation0]]
  $region57: #{tpu_custom_call.1} parent=0
    _
  %s8 = ssub.s32 1, %s6
  %s9 = scalar_select 0, %s8, %s6
  $region1: #{tpu_custom_call.1} parent=0
    #allocation2 [shape = 'u8[8192]{0}', space=vmem, size = 0x2000, scoped, tag = 'output window, operand 0']
    #allocation3 [shape = 's32[2]{0}', space=sflag, size = 0x8, scoped, tag = 'scoped memory for tpu_custom_call.1']
    %10 = vsyncpa [#allocation3], 0
    %s11 = scalar_lea.sflag [#allocation3], 1
    %12 = vsyncpa %s11, 0
    loop: start=0, step=1, limit=4
    $region2: #{tpu_custom_call.1} parent=1 // loop_pre_header
      _
    $region3: #{tpu_custom_call.1} parent=1 // loop_header
      %s14 = sphi 0, %s18
      %p15 = scmp.ge.s32.totalorder %s14, 4
      %s21 = sphi 0, %s40
      %s22 = sphi 0, %s36
      %s23 = sphi 0, %s32
      %s24 = sphi 0, %s21
      %s25 = sphi 0, %s22
      %s26 = sphi 0, %s23
      %s27 = sphi 0, %s24
      %s28 = sphi 0, %s25
      %s29 = sphi 0, %s26
      %s45 = sphi 0, %s47
      %s48 = sphi 0, %s45
      %s49 = sphi 0, %s48
      %s65 = sphi 0, %s49
      %s71 = sphi 0, %s73
      %s74 = sphi 0, %s71
      %s75 = sphi 0, %s74
      %s91 = sphi 0, %s75
      %s97 = sphi 0, %s99
      %s100 = sphi 0, %s97
      %s101 = sphi 0, %s100
      %s117 = sphi 0, %s101
      %s125 = sphi 0, %s127
      %s128 = sphi 0, %s125
      %s129 = sphi 0, %s128
      %s145 = sphi 0, %s129
      %s149 = sphi 0, %s149
      %s151 = sphi 0, %s149
      %s152 = sphi 0, %s151
      %s166 = sphi 0, %s152
      %s176 = sphi 0, %s178
      %s179 = sphi 0, %s176
      %s180 = sphi 0, %s179
      %s196 = sphi 0, %s180
    $region4: #{tpu_custom_call.1} parent=1 // loop_header_branch
      %17 = sbr.rel (%p15) target = $region8
    $region5: #{tpu_custom_call.1} parent=1 // loop_body
      %s19 = ssub.s32 %s14, 1
      %s20 = ssub.s32 %s14, 2
      %s30 = sadd.s32 1, %s23
      %p31 = scmp.ge.s32.totalorder %s30, 1
      %s32 = scalar_select %p31, 0, %s30
      %s33 = sadd.s32 1, %s22
      %s34 = scalar_select %p31, %s33, %s22
      %p35 = scmp.ge.s32.totalorder %s34, 1
      %s36 = scalar_select %p35, 0, %s34
      %s37 = sadd.s32 1, %s21
      %s38 = scalar_select %p35, %s37, %s21
      %p39 = scmp.ge.s32.totalorder %s38, 2
      %s40 = scalar_select %p39, 0, %s38
      %s41 = ssub.s32 %s21, %s40
      %s42 = ssub.s32 %s23, %s32
      %s43 = sor.u32 %s41, %s42
      %p44 = scmp.eq.s32.totalorder %s43, 0
      %s46 = sadd.s32 %s45, 1
      %s47 = scalar_select %p44, %s45, %s46
      %p50 = pneg %p44
      %p51 = scmp.eq.s32.totalorder %s14, 1
      %p52 = por %p50, %p51
      %p53 = scmp.ne.s32.totalorder %s45, %s48
      %p54 = scmp.eq.s32.totalorder %s14, 0
      %p55 = por %p53, %p54
      %p56 = scmp.ne.s32.totalorder %s45, %s48
      %p57 = scmp.eq.s32.totalorder %s19, 1
      %p58 = por %p56, %p57
      %p59 = scmp.ne.s32.totalorder %s48, %s49
      %p60 = scmp.eq.s32.totalorder %s19, 0
      %p61 = por %p59, %p60
      %p62 = scmp.ne.s32.totalorder %s48, %s49
      %p63 = scmp.eq.s32.totalorder %s20, 1
      %p64 = por %p62, %p63
      %p66 = scmp.ne.s32.totalorder %s49, %s65
      %p67 = scmp.eq.s32.totalorder %s20, 0
      %p68 = por %p66, %p67
      %s69 = ssub.s32 %s22, %s36
      %p70 = scmp.eq.s32.totalorder %s69, 0
      %s72 = sadd.s32 %s71, 1
      %s73 = scalar_select %p70, %s71, %s72
      %p76 = pneg %p70
      %p77 = scmp.eq.s32.totalorder %s14, 1
      %p78 = por %p76, %p77
      %p79 = scmp.ne.s32.totalorder %s71, %s74
      %p80 = scmp.eq.s32.totalorder %s14, 0
      %p81 = por %p79, %p80
      %p82 = scmp.ne.s32.totalorder %s71, %s74
      %p83 = scmp.eq.s32.totalorder %s19, 1
      %p84 = por %p82, %p83
      %p85 = scmp.ne.s32.totalorder %s74, %s75
      %p86 = scmp.eq.s32.totalorder %s19, 0
      %p87 = por %p85, %p86
      %p88 = scmp.ne.s32.totalorder %s74, %s75
      %p89 = scmp.eq.s32.totalorder %s20, 1
      %p90 = por %p88, %p89
      %p92 = scmp.ne.s32.totalorder %s75, %s91
      %p93 = scmp.eq.s32.totalorder %s20, 0
      %p94 = por %p92, %p93
      %s95 = ssub.s32 %s22, %s36
      %p96 = scmp.eq.s32.totalorder %s95, 0
      %s98 = sadd.s32 %s97, 1
      %s99 = scalar_select %p96, %s97, %s98
      %p102 = pneg %p96
      %p103 = scmp.eq.s32.totalorder %s14, 1
      %p104 = por %p102, %p103
      %p105 = scmp.ne.s32.totalorder %s97, %s100
      %p106 = scmp.eq.s32.totalorder %s14, 0
      %p107 = por %p105, %p106
      %p108 = scmp.ne.s32.totalorder %s97, %s100
      %p109 = scmp.eq.s32.totalorder %s19, 1
      %p110 = por %p108, %p109
      %p111 = scmp.ne.s32.totalorder %s100, %s101
      %p112 = scmp.eq.s32.totalorder %s19, 0
      %p113 = por %p111, %p112
      %p114 = scmp.ne.s32.totalorder %s100, %s101
      %p115 = scmp.eq.s32.totalorder %s20, 1
      %p116 = por %p114, %p115
      %p118 = scmp.ne.s32.totalorder %s101, %s117
      %p119 = scmp.eq.s32.totalorder %s20, 0
      %p120 = por %p118, %p119
      %s121 = ssub.s32 %s21, %s40
      %s122 = ssub.s32 %s22, %s36
      %s123 = sor.u32 %s121, %s122
      %p124 = scmp.eq.s32.totalorder %s123, 0
      %s126 = sadd.s32 %s125, 1
      %s127 = scalar_select %p124, %s125, %s126
      %p130 = pneg %p124
      %p131 = scmp.eq.s32.totalorder %s14, 1
      %p132 = por %p130, %p131
      %p133 = scmp.ne.s32.totalorder %s125, %s128
      %p134 = scmp.eq.s32.totalorder %s14, 0
      %p135 = por %p133, %p134
      %p136 = scmp.ne.s32.totalorder %s125, %s128
      %p137 = scmp.eq.s32.totalorder %s19, 1
      %p138 = por %p136, %p137
      %p139 = scmp.ne.s32.totalorder %s128, %s129
      %p140 = scmp.eq.s32.totalorder %s19, 0
      %p141 = por %p139, %p140
      %p142 = scmp.ne.s32.totalorder %s128, %s129
      %p143 = scmp.eq.s32.totalorder %s20, 1
      %p144 = por %p142, %p143
      %p146 = scmp.ne.s32.totalorder %s129, %s145
      %p147 = scmp.eq.s32.totalorder %s20, 0
      %p148 = por %p146, %p147
      %s150 = sadd.s32 %s149, 1
      %p153 = scmp.eq.s32.totalorder %s14, 1
      %p154 = scmp.ne.s32.totalorder %s149, %s151
      %p155 = scmp.eq.s32.totalorder %s14, 0
      %p156 = por %p154, %p155
      %p157 = scmp.ne.s32.totalorder %s149, %s151
      %p158 = scmp.eq.s32.totalorder %s19, 1
      %p159 = por %p157, %p158
      %p160 = scmp.ne.s32.totalorder %s151, %s152
      %p161 = scmp.eq.s32.totalorder %s19, 0
      %p162 = por %p160, %p161
      %p163 = scmp.ne.s32.totalorder %s151, %s152
      %p164 = scmp.eq.s32.totalorder %s20, 1
      %p165 = por %p163, %p164
      %p167 = scmp.ne.s32.totalorder %s152, %s166
      %p168 = scmp.eq.s32.totalorder %s20, 0
      %p169 = por %p167, %p168
      %s170 = ssub.s32 %s21, %s40
      %s171 = ssub.s32 %s23, %s32
      %s172 = sor.u32 %s170, %s171
      %s173 = ssub.s32 %s22, %s36
      %s174 = sor.u32 %s172, %s173
      %p175 = scmp.eq.s32.totalorder %s174, 0
      %s177 = sadd.s32 %s176, 1
      %s178 = scalar_select %p175, %s176, %s177
      %p181 = pneg %p175
      %p182 = scmp.eq.s32.totalorder %s14, 1
      %p183 = por %p181, %p182
      %p184 = scmp.ne.s32.totalorder %s176, %s179
      %p185 = scmp.eq.s32.totalorder %s14, 0
      %p186 = por %p184, %p185
      %p187 = scmp.ne.s32.totalorder %s176, %s179
      %p188 = scmp.eq.s32.totalorder %s19, 1
      %p189 = por %p187, %p188
      %p190 = scmp.ne.s32.totalorder %s179, %s180
      %p191 = scmp.eq.s32.totalorder %s19, 0
      %p192 = por %p190, %p191
      %p193 = scmp.ne.s32.totalorder %s179, %s180
      %p194 = scmp.eq.s32.totalorder %s20, 1
      %p195 = por %p193, %p194
      %p197 = scmp.ne.s32.totalorder %s180, %s196
      %p198 = scmp.eq.s32.totalorder %s20, 0
      %p199 = por %p197, %p198
      %p200 = scmp.le.s32.totalorder 1, %s14
      %p201 = scmp.lt.s32.totalorder %s14, 3
      %p202 = pnand %p200, %p201
      %p203 = pneg %p202
      // Predicated region
      $region9: #{tpu_custom_call.1} parent=5 // pred_check
        _
      $region10: #{tpu_custom_call.1} parent=5 // pred_check_branch
        %205 = sbr.rel (%p202) target = $region12
      $region11: #{tpu_custom_call.1} parent=5 // pred_region
        %s206 = ssub.s32 %s14, 1
        // Predicated region
        $region13: #{tpu_custom_call.1} parent=11 // pred_check
          %p207 = pneg %p87
        $region14: #{tpu_custom_call.1} parent=11 // pred_check_branch
          %209 = sbr.rel (%p207) target = $region16
        $region15: #{tpu_custom_call.1} parent=11 // pred_region
          %s210 = smul.u32 16, %s25
          %p211 = scmp.lt.s32.totalorder %s210, 15
          %s212 = scalar_select %p211, %s210, 15
          %s213 = smul.addr %s212, 8
          %s214 = scalar_lea.vmem %s1, %s213
          %s215 = smul.u32 16, %s25
        $region16: #{tpu_custom_call.1} parent=11 // pred_fallthru
          _
        // Predicated region
        $region17: #{tpu_custom_call.1} parent=11 // pred_check
          %p216 = pneg %p113
        $region18: #{tpu_custom_call.1} parent=11 // pred_check_branch
          %218 = sbr.rel (%p216) target = $region20
        $region19: #{tpu_custom_call.1} parent=11 // pred_region
          %p219 = scmp.lt.s32.totalorder %s25, 0
          %s220 = scalar_select %p219, %s25, 0
          %s221 = scalar_lea.vmem %s2, %s220
        $region20: #{tpu_custom_call.1} parent=11 // pred_fallthru
          _
        // Predicated region
        $region21: #{tpu_custom_call.1} parent=11 // pred_check
          %p222 = pneg %p162
        $region22: #{tpu_custom_call.1} parent=11 // pred_check_branch
          %224 = sbr.rel (%p222) target = $region24
        $region23: #{tpu_custom_call.1} parent=11 // pred_region
          _
        $region24: #{tpu_custom_call.1} parent=11 // pred_fallthru
          _
      $region12: #{tpu_custom_call.1} parent=5 // pred_fallthru
        _
      %p225 = scmp.lt.s32.totalorder %s14, 2
      // Predicated region
      $region25: #{tpu_custom_call.1} parent=5 // pred_check
        %p226 = pneg %p225
      $region26: #{tpu_custom_call.1} parent=5 // pred_check_branch
        %228 = sbr.rel (%p226) target = $region28
      $region27: #{tpu_custom_call.1} parent=5 // pred_region
        // Predicated region
        $region29: #{tpu_custom_call.1} parent=27 // pred_check
          %p229 = pneg %p55
        $region30: #{tpu_custom_call.1} parent=27 // pred_check_branch
          %231 = sbr.rel (%p229) target = $region32
        $region31: #{tpu_custom_call.1} parent=27 // pred_region
          %p232 = scmp.lt.s32.totalorder %s21, 1
          %s233 = scalar_select %p232, %s21, 1
          %p234 = scmp.lt.s32.totalorder %s23, 0
          %s235 = scalar_select %p234, %s23, 0
          %s236 = sadd.s32 %s235, %s233
          %s237 = smul.addr %s236, 8
          %s238 = scalar_lea.vmem %s0, %s237
        $region32: #{tpu_custom_call.1} parent=27 // pred_fallthru
          _
        // Predicated region
        $region33: #{tpu_custom_call.1} parent=27 // pred_check
          %p239 = pneg %p135
        $region34: #{tpu_custom_call.1} parent=27 // pred_check_branch
          %241 = sbr.rel (%p239) target = $region36
        $region35: #{tpu_custom_call.1} parent=27 // pred_region
          %p242 = scmp.lt.s32.totalorder %s21, 1
          %s243 = scalar_select %p242, %s21, 1
          %p244 = scmp.lt.s32.totalorder %s22, 0
          %s245 = scalar_select %p244, %s22, 0
          %s246 = sadd.s32 %s245, %s243
          %s247 = smul.addr %s246, 8
          %s248 = scalar_lea.vmem %s3, %s247
        $region36: #{tpu_custom_call.1} parent=27 // pred_fallthru
          _
      $region28: #{tpu_custom_call.1} parent=5 // pred_fallthru
        _
      %p249 = scmp.le.s32.totalorder 1, %s14
      %p250 = scmp.lt.s32.totalorder %s14, 3
      %p251 = pnand %p249, %p250
      %p252 = pneg %p251
      // Predicated region
      $region37: #{tpu_custom_call.1} parent=5 // pred_check
        _
      $region38: #{tpu_custom_call.1} parent=5 // pred_check_branch
        %254 = sbr.rel (%p251) target = $region40
      $region39: #{tpu_custom_call.1} parent=5 // pred_region
        %s255 = ssub.s32 %s14, 1
        %p256 = scmp.lt.s32.totalorder %s24, 1
        %s257 = scalar_select %p256, %s24, 1
        %p258 = scmp.lt.s32.totalorder %s26, 0
        %s259 = scalar_select %p258, %s26, 0
        %s260 = sadd.s32 %s259, %s257
        %s261 = smul.addr %s260, 8
        %s262 = scalar_lea.vmem %s0, %s261
        %p263 = pneg %p61
        %p264 = pneg %p58
        %s265 = smul.u32 16, %s25
        %p266 = scmp.lt.s32.totalorder %s265, 15
        %s267 = scalar_select %p266, %s265, 15
        %s268 = smul.addr %s267, 8
        %s269 = scalar_lea.vmem %s1, %s268
        %p270 = pneg %p87
        %p271 = pneg %p84
        %p272 = scmp.lt.s32.totalorder %s25, 0
        %s273 = scalar_select %p272, %s25, 0
        %s274 = scalar_lea.vmem %s2, %s273
        %p275 = pneg %p113
        %p276 = pneg %p110
        %p277 = scmp.lt.s32.totalorder %s24, 1
        %s278 = scalar_select %p277, %s24, 1
        %p279 = scmp.lt.s32.totalorder %s25, 0
        %s280 = scalar_select %p279, %s25, 0
        %s281 = sadd.s32 %s280, %s278
        %s282 = smul.addr %s281, 8
        %s283 = scalar_lea.vmem %s3, %s282
        %p284 = pneg %p141
        %p285 = pneg %p138
        %p286 = pneg %p162
        %p287 = pneg %p159
        %p288 = pneg %p192
        %p289 = pneg %p189
        %s290 = sand.u32 %s179, 1
        %s291 = scalar_lea.sflag [#allocation3], %s290
        %s292 = sand.u32 %s179, 1
        %s293 = smul.addr %s292, 8
        %s294 = scalar_lea.vmem [#allocation2], %s293
        %p295 = scmp.lt.s32.totalorder %s24, 1
        %s296 = scalar_select %p295, %s24, 1
        %p297 = scmp.lt.s32.totalorder %s26, 0
        %s298 = scalar_select %p297, %s26, 0
        %s299 = sadd.s32 %s298, %s296
        %s300 = smul.addr %s299, 8
        %s301 = scalar_lea.vmem %s0, %s300
        %s302 = smul.u32 16, %s25
        %p303 = scmp.lt.s32.totalorder %s302, 15
        %s304 = scalar_select %p303, %s302, 15
        %s305 = smul.addr %s304, 8
        %s306 = scalar_lea.vmem %s1, %s305
        %s307 = smul.u32 16, %s25
        %p308 = scmp.lt.s32.totalorder %s25, 0
        %s309 = scalar_select %p308, %s25, 0
        %s310 = scalar_lea.vmem %s2, %s309
        %p311 = scmp.lt.s32.totalorder %s24, 1
        %s312 = scalar_select %p311, %s24, 1
        %p313 = scmp.lt.s32.totalorder %s25, 0
        %s314 = scalar_select %p313, %s25, 0
        %s315 = sadd.s32 %s314, %s312
        %s316 = smul.addr %s315, 8
        %s317 = scalar_lea.vmem %s3, %s316
        %v318 = vld [vmem:[%s301] sm:$0xff]
        %v319 = vld [vmem:[%s306] sm:$0xff]
        %v320 = vld [vmem:[%s306 + $0x8] sm:$0xff]
        %v321 = vld [vmem:[%s306 + $0x10] sm:$0xff]
        %v322 = vld [vmem:[%s306 + $0x18] sm:$0xff]
        %v323 = vld [vmem:[%s306 + $0x20] sm:$0xff]
        %v324 = vld [vmem:[%s306 + $0x28] sm:$0xff]
        %v325 = vld [vmem:[%s306 + $0x30] sm:$0xff]
        %v326 = vld [vmem:[%s306 + $0x38] sm:$0xff]
        %v327 = vld [vmem:[%s306 + $0x40] sm:$0xff]
        %v328 = vld [vmem:[%s306 + $0x48] sm:$0xff]
        %v329 = vld [vmem:[%s306 + $0x50] sm:$0xff]
        %v330 = vld [vmem:[%s306 + $0x58] sm:$0xff]
        %v331 = vld [vmem:[%s306 + $0x60] sm:$0xff]
        %v332 = vld [vmem:[%s306 + $0x68] sm:$0xff]
        %v333 = vld [vmem:[%s306 + $0x70] sm:$0xff]
        %v334 = vld [vmem:[%s306 + $0x78] sm:$0xff]
        %v335 = vld [vmem:[%s310] sm:$0x1]
        %v337 = vlaneseq
        %v338 = vshrl.u32 %v337, 7
        %v339 = vsub.s32 0, %v338
        %v340 = vrot.slane %v335, %v339
        %vm342 = vcmask 261120
        %v344 = vsel %vm342, %v318, 0
        %v347 = vsel %vm342, %v319, 0
        %v350 = vsel %vm342, %v320, 0
        %v353 = vsel %vm342, %v321, 0
        %v356 = vsel %vm342, %v322, 0
        %v359 = vsel %vm342, %v323, 0
        %v362 = vsel %vm342, %v324, 0
        %v365 = vsel %vm342, %v325, 0
        %v368 = vsel %vm342, %v326, 0
        %v371 = vsel %vm342, %v327, 0
        %v374 = vsel %vm342, %v328, 0
        %v377 = vsel %vm342, %v329, 0
        %v380 = vsel %vm342, %v330, 0
        %v383 = vsel %vm342, %v331, 0
        %v386 = vsel %vm342, %v332, 0
        %v389 = vsel %vm342, %v333, 0
        %v392 = vsel %vm342, %v334, 0
        %394 = vmatprep.subr.mxu0 0.0
        %395 = vmatpush1.xpose.msra.mxu0 %v347
        %396 = vmatprep.subr.mxu0 0.0
        %397 = vmatpush1.xpose.msra.mxu0 %v350
        %398 = vmatprep.subr.mxu0 0.0
        %399 = vmatpush1.xpose.msra.mxu0 %v353
        %400 = vmatprep.subr.mxu0 0.0
        %401 = vmatpush1.xpose.msra.mxu0 %v356
        %402 = vmatprep.subr.mxu0 0.0
        %403 = vmatpush1.xpose.msra.mxu0 %v359
        %404 = vmatprep.subr.mxu0 0.0
        %405 = vmatpush1.xpose.msra.mxu0 %v362
        %406 = vmatprep.subr.mxu0 0.0
        %407 = vmatpush1.xpose.msra.mxu0 %v365
        %408 = vmatprep.subr.mxu0 0.0
        %409 = vmatpush1.xpose.msra.mxu0 %v368
        %410 = vmatprep.subr.mxu0 0.0
        %411 = vmatpush1.xpose.msra.mxu0 %v371
        %412 = vmatprep.subr.mxu0 0.0
        %413 = vmatpush1.xpose.msra.mxu0 %v374
        %414 = vmatprep.subr.mxu0 0.0
        %415 = vmatpush1.xpose.msra.mxu0 %v377
        %416 = vmatprep.subr.mxu0 0.0
        %417 = vmatpush1.xpose.msra.mxu0 %v380
        %418 = vmatprep.subr.mxu0 0.0
        %419 = vmatpush1.xpose.msra.mxu0 %v383
        %420 = vmatprep.subr.mxu0 0.0
        %421 = vmatpush1.xpose.msra.mxu0 %v386
        %422 = vmatprep.subr.mxu0 0.0
        %423 = vmatpush1.xpose.msra.mxu0 %v389
        %424 = vmatprep.subr.mxu0 0.0
        %425 = vmatpush1.xpose.msra.mxu0 %v392
        %426 = vmatprep.subr.mxu0 0.0
        %427 = vmatpush1.xpose.msra.mxu0 0.0
        %428 = vmatprep.subr.mxu0 0.0
        %429 = vmatpush1.xpose.msra.mxu0 0.0
        %430 = vmatprep.subr.mxu0 0.0
        %431 = vmatpush1.xpose.msra.mxu0 0.0
        %432 = vmatprep.subr.mxu0 0.0
        %433 = vmatpush1.xpose.msra.mxu0 0.0
        %434 = vmatprep.subr.mxu0 0.0
        %435 = vmatpush1.xpose.msra.mxu0 0.0
        %436 = vmatprep.subr.mxu0 0.0
        %437 = vmatpush1.xpose.msra.mxu0 0.0
        %438 = vmatprep.subr.mxu0 0.0
        %439 = vmatpush1.xpose.msra.mxu0 0.0
        %440 = vmatprep.subr.mxu0 0.0
        %441 = vmatpush1.xpose.msra.mxu0 0.0
        %442 = vmatprep.subr.mxu0 0.0
        %443 = vmatpush1.xpose.msra.mxu0 0.0
        %444 = vmatprep.subr.mxu0 0.0
        %445 = vmatpush1.xpose.msra.mxu0 0.0
        %446 = vmatprep.subr.mxu0 0.0
        %447 = vmatpush1.xpose.msra.mxu0 0.0
        %448 = vmatprep.subr.mxu0 0.0
        %449 = vmatpush1.xpose.msra.mxu0 0.0
        %450 = vmatprep.subr.mxu0 0.0
        %451 = vmatpush1.xpose.msra.mxu0 0.0
        %452 = vmatprep.subr.mxu0 0.0
        %453 = vmatpush1.xpose.msra.mxu0 0.0
        %454 = vmatprep.subr.mxu0 0.0
        %455 = vmatpush1.xpose.msra.mxu0 0.0
        %456 = vmatprep.subr.mxu0 0.0
        %457 = vmatpush1.xpose.msra.mxu0 0.0
        %458 = vmatprep.mubr.f32.mxu0 0.0
        %459 = vmatmul.mubr.f32.gmra.mrb[0].mxu0 %v344
        %v460 = vpop.f32.mrb[0].mxu0
        %v461 = vadd.f32 %v340, %v460
        %v462 = vpop.f32.mrb[0].mxu0
        %463 = vdwg.mxu0
        %464 = vst [vmem:[%s294] sm:$0xff] %v461
        %p465 = scmp.eq.s32.totalorder %s26, 0
        // Predicated region
        $region41: #{tpu_custom_call.1} parent=39 // pred_check
          %p466 = pneg %p465
        $region42: #{tpu_custom_call.1} parent=39 // pred_check_branch
          %468 = sbr.rel (%p466) target = $region44
        $region43: #{tpu_custom_call.1} parent=39 // pred_region
          %v469 = vld [vmem:[%s4] sm:$0x1]
          %v470 = vld [vmem:[%s317] sm:$0xff]
          %vm471 = vcmask 64512
          %v473 = vsel %vm471, %v469, 0
          %475 = vmatprep.subr.mxu0 0.0
          %476 = vmatpush1.msra.mxu0 %v470
          %477 = vmatprep.subr.mxu0 0.0
          %478 = vmatpush1.msra.mxu0 0.0
          %479 = vmatprep.subr.mxu0 0.0
          %480 = vmatpush1.msra.mxu0 0.0
          %481 = vmatprep.subr.mxu0 0.0
          %482 = vmatpush1.msra.mxu0 0.0
          %483 = vmatprep.subr.mxu0 0.0
          %484 = vmatpush1.msra.mxu0 0.0
          %485 = vmatprep.subr.mxu0 0.0
          %486 = vmatpush1.msra.mxu0 0.0
          %487 = vmatprep.subr.mxu0 0.0
          %488 = vmatpush1.msra.mxu0 0.0
          %489 = vmatprep.subr.mxu0 0.0
          %490 = vmatpush1.msra.mxu0 0.0
          %491 = vmatprep.subr.mxu0 0.0
          %492 = vmatpush1.msra.mxu0 0.0
          %493 = vmatprep.subr.mxu0 0.0
          %494 = vmatpush1.msra.mxu0 0.0
          %495 = vmatprep.subr.mxu0 0.0
          %496 = vmatpush1.msra.mxu0 0.0
          %497 = vmatprep.subr.mxu0 0.0
          %498 = vmatpush1.msra.mxu0 0.0
          %499 = vmatprep.subr.mxu0 0.0
          %500 = vmatpush1.msra.mxu0 0.0
          %501 = vmatprep.subr.mxu0 0.0
          %502 = vmatpush1.msra.mxu0 0.0
          %503 = vmatprep.subr.mxu0 0.0
          %504 = vmatpush1.msra.mxu0 0.0
          %505 = vmatprep.subr.mxu0 0.0
          %506 = vmatpush1.msra.mxu0 0.0
          %507 = vmatprep.subr.mxu0 0.0
          %508 = vmatpush1.msra.mxu0 0.0
          %509 = vmatprep.subr.mxu0 0.0
          %510 = vmatpush1.msra.mxu0 0.0
          %511 = vmatprep.subr.mxu0 0.0
          %512 = vmatpush1.msra.mxu0 0.0
          %513 = vmatprep.subr.mxu0 0.0
          %514 = vmatpush1.msra.mxu0 0.0
          %515 = vmatprep.subr.mxu0 0.0
          %516 = vmatpush1.msra.mxu0 0.0
          %517 = vmatprep.subr.mxu0 0.0
          %518 = vmatpush1.msra.mxu0 0.0
          %519 = vmatprep.subr.mxu0 0.0
          %520 = vmatpush1.msra.mxu0 0.0
          %521 = vmatprep.subr.mxu0 0.0
          %522 = vmatpush1.msra.mxu0 0.0
          %523 = vmatprep.subr.mxu0 0.0
          %524 = vmatpush1.msra.mxu0 0.0
          %525 = vmatprep.subr.mxu0 0.0
          %526 = vmatpush1.msra.mxu0 0.0
          %527 = vmatprep.subr.mxu0 0.0
          %528 = vmatpush1.msra.mxu0 0.0
          %529 = vmatprep.subr.mxu0 0.0
          %530 = vmatpush1.msra.mxu0 0.0
          %531 = vmatprep.subr.mxu0 0.0
          %532 = vmatpush1.msra.mxu0 0.0
          %533 = vmatprep.subr.mxu0 0.0
          %534 = vmatpush1.msra.mxu0 0.0
          %535 = vmatprep.subr.mxu0 0.0
          %536 = vmatpush1.msra.mxu0 0.0
          %537 = vmatprep.subr.mxu0 0.0
          %538 = vmatpush1.msra.mxu0 0.0
          %539 = vmatprep.mubr.f32.mxu0 0.0
          %540 = vmatmul.mubr.f32.gmra.mrb[0].mxu0 %v473
          %v541 = vpop.f32.mrb[0].mxu0
          %v542 = vadd.f32 0.0, %v541
          %v543 = vpop.f32.mrb[0].mxu0
          %544 = vdwg.mxu0
          %v545 = vadd.f32 %v461, %v542
          %546 = vst [vmem:[%s294] sm:$0x1] %v545
        $region44: #{tpu_custom_call.1} parent=39 // pred_fallthru
          _
        %s547 = sand.u32 %s179, 1
        %s548 = scalar_lea.sflag [#allocation3], %s547
        %s549 = sand.u32 %s179, 1
        %s550 = smul.addr %s549, 8
        %s551 = scalar_lea.vmem [#allocation2], %s550
        // Predicated region
        $region45: #{tpu_custom_call.1} parent=39 // pred_check
          %p552 = pneg %p189
        $region46: #{tpu_custom_call.1} parent=39 // pred_check_branch
          %554 = sbr.rel (%p552) target = $region48
        $region47: #{tpu_custom_call.1} parent=39 // pred_region
          %s556 = ssub.s32 128, 128
          %557 = vsyncadd %s548, %s556
          %s558 = sadd.s32 %s25, %s26
          %s559 = sadd.s32 %s558, %s24
          %s560 = smul.addr %s559, 128
          %s561 = scalar_lea.hbm %s5, %s560
          %s563 = sshll.u32 %s551, 4
          %s564 = int_to_ptr.vmem [resolvable:$true] %s563
          %566 = dma.vmem_to_hbm [thread:$0]  %s564, 128, %s561, %s548
        $region48: #{tpu_custom_call.1} parent=39 // pred_fallthru
          _
      $region40: #{tpu_custom_call.1} parent=5 // pred_fallthru
        _
      %p567 = scmp.le.s32.totalorder 2, %s14
      // Predicated region
      $region49: #{tpu_custom_call.1} parent=5 // pred_check
        %p568 = pneg %p567
      $region50: #{tpu_custom_call.1} parent=5 // pred_check_branch
        %570 = sbr.rel (%p568) target = $region52
      $region51: #{tpu_custom_call.1} parent=5 // pred_region
        %s571 = ssub.s32 %s14, 2
        // Predicated region
        $region53: #{tpu_custom_call.1} parent=51 // pred_check
          %p572 = pneg %p195
        $region54: #{tpu_custom_call.1} parent=51 // pred_check_branch
          %574 = sbr.rel (%p572) target = $region56
        $region55: #{tpu_custom_call.1} parent=51 // pred_region
          %s575 = sand.u32 %s180, 1
          %s576 = scalar_lea.sflag [#allocation3], %s575
          %s577 = sand.u32 %s180, 1
          %s578 = smul.addr %s577, 8
          %s579 = scalar_lea.vmem [#allocation2], %s578
          %580 = dma.done %s576, 128
        $region56: #{tpu_custom_call.1} parent=51 // pred_fallthru
          _
      $region52: #{tpu_custom_call.1} parent=5 // pred_fallthru
        _
    $region6: #{tpu_custom_call.1} parent=1 // loop_footer
      %s18 = sadd.s32 1, %s14
    $region7: #{tpu_custom_call.1} parent=1 // loop_footer_branch
      %13 = sbr.rel target = $region3
    $region8: #{tpu_custom_call.1} parent=1 // loop_exit
      _
    %581 = vsyncpa [#allocation3], 1
    %s582 = scalar_lea.sflag [#allocation3], 1
    %583 = vsyncpa %s582, 1

</llo_original>
